<compile_context>
chip_gen: v6e
topology: v6e:2x2x1
jax: 0.10.0
libtpu: 0.0.40
codegen_flags: <defaults>
</compile_context>

<pallas_src>
from functools import partial

import jax
import jax.numpy as jnp
from jax.experimental import pallas as pl
from jax.experimental.pallas import tpu as pltpu

LANE = 128  # output-feature axis padded to a full lane width (lane-dense stores)


# --------------------------------------------------------------------------- #
# Stage 1: edge-space accumulation, reduced over vertex tiles.
#   E^T (out_pad, num_e) = sum_tiles (X_tile W^T + b)^T H_tile ; then *= D_e^{-1}
# --------------------------------------------------------------------------- #
def edge_accum_kernel(x_ref, h_ref, wT_ref, b_ref, eT_ref, de_acc):
    step = pl.program_id(0)

    @pl.when(step == 0)
    def _init():
        eT_ref[...] = jnp.zeros_like(eT_ref)
        de_acc[...] = jnp.zeros_like(de_acc)

    h = h_ref[...]                                           # (tv, num_e), compute dtype
    # Edge degrees accumulate in f32 (exact for a 0/1 incidence even if h is bf16).
    de_acc[...] += jnp.sum(h.astype(jnp.float32), axis=0, keepdims=True)

    # theta on this vertex tile: Y = X W^T + b  (f32 MXU accumulation).
    y = jnp.dot(x_ref[...], wT_ref[...],
                preferred_element_type=jnp.float32) + b_ref[...]

    # E^T += Y^T H  -- contract over the vertex axis (axis 0 of both); no transpose op.
    eT_ref[...] += jax.lax.dot_general(
        y.astype(h.dtype), h,
        dimension_numbers=(((0,), (0,)), ((), ())),
        preferred_element_type=jnp.float32)

    @pl.when(step == pl.num_programs(0) - 1)
    def _finalize():
        de = de_acc[...]                                     # (1, num_e) f32
        de_inv = jnp.where(de > 0, 1.0 / de, 0.0)            # exact; empty edge -> 0
        eT_ref[...] = eT_ref[...] * de_inv                   # fold D_e^{-1} once (lane bcast)


# --------------------------------------------------------------------------- #
# Stage 2: per-vertex-tile e2v mean + ReLU (independent tiles -> "parallel").
#   Z_tile = relu(D_v^{-1} H_tile E)
# --------------------------------------------------------------------------- #
def v2v_relu_kernel(h_ref, eT_ref, o_ref):
    h = h_ref[...]                                           # (tv, num_e)
    dv = jnp.sum(h.astype(jnp.float32), axis=1, keepdims=True)   # (tv, 1) f32
    dv_inv = jnp.where(dv > 0, 1.0 / dv, 0.0)                # exact; isolated vertex -> 0
    # H_tile @ E  ==  contract last axes of h and E^T (A.B^T MXU pattern).
    z = jax.lax.dot_general(
        h, eT_ref[...].astype(h.dtype),
        dimension_numbers=(((1,), (1,)), ((), ())),
        preferred_element_type=jnp.float32)
    o_ref[...] = jnp.maximum(z * dv_inv, 0.0).astype(o_ref.dtype)
    # TODO(synk): nn.Dropout train-mode RNG masking is not reproduced (PyTorch RNG stream
    # cannot be matched); eval-mode identity is applied.


# --------------------------------------------------------------------------- #
# Wrapper
# --------------------------------------------------------------------------- #
def prepare_theta_params(W, b, compute_dtype=jnp.float32):
    """Pad nn.Linear params to a 128-lane output width ONCE (they are parameters)."""
    out_dim, in_dim = W.shape
    out_pad = ((out_dim + LANE - 1) // LANE) * LANE
    wT = jnp.zeros((in_dim, out_pad), compute_dtype).at[:, :out_dim].set(
        W.T.astype(compute_dtype))
    b2 = jnp.zeros((1, out_pad), jnp.float32).at[:, :out_dim].set(
        b.astype(jnp.float32))
    return wT, b2


def _pick_tile_v(num_v, requested=None, cap=512):
    if requested is not None:
        if num_v % requested:
            raise ValueError("tile_v must divide num_v")
        return requested
    if num_v <= 8 or num_v % 8:
        return num_v
    t = min(cap - cap % 8, num_v)
    while num_v % t:
        t -= 8
    return t


@partial(jax.jit, static_argnames=("out_dim", "tile_v", "compute_dtype"))
def con_hypergraph_conv(X, wT_pad, b_pad, H, *, out_dim, tile_v=None,
                        compute_dtype=jnp.float32):
    """ConHypergraphConv forward (eval mode).

    X: (num_v, in_dim) f32; wT_pad/b_pad from prepare_theta_params;
    H: (num_v, num_e) dense 0/1 incidence matrix.
    """
    num_v, in_dim = X.shape
    num_e = H.shape[1]
    out_pad = wT_pad.shape[1]
    tv = _pick_tile_v(num_v, tile_v)
    n_tiles = num_v // tv
    csize = jnp.dtype(compute_dtype).itemsize

    Xc = X.astype(compute_dtype)
    Hc = H.astype(compute_dtype)   # exact for 0/1 incidence; halves H HBM traffic if bf16

    # VMEM budgets: tiles * double-buffers + resident accumulator, with headroom.
    s1 = (2 * tv * (in_dim + num_e) * csize + 2 * in_dim * out_pad * csize
          + 2 * out_pad * 4 + out_pad * num_e * 4 + num_e * 4)
    s2 = (2 * tv * num_e * csize + 2 * out_pad * num_e * 4 + 2 * tv * out_pad * 4)
    lim = lambda n: int(min(32 << 20, max(8 << 20, 4 * n)))

    # -- stage 1: E^T = (D_e^{-1} H^T (X W^T + b))^T, reduced over vertex tiles --------
    eT = pl.pallas_call(
        edge_accum_kernel,
        out_shape=jax.ShapeDtypeStruct((out_pad, num_e), jnp.float32),
        grid=(n_tiles,),
        in_specs=[
            pl.BlockSpec((tv, in_dim), lambda k: (k, 0)),
            pl.BlockSpec((tv, num_e), lambda k: (k, 0)),
            pl.BlockSpec((in_dim, out_pad), lambda k: (0, 0)),
            pl.BlockSpec((1, out_pad), lambda k: (0, 0)),
        ],
        out_specs=pl.BlockSpec((out_pad, num_e), lambda k: (0, 0)),
        scratch_shapes=[pltpu.VMEM((1, num_e), jnp.float32)],
        compiler_params=pltpu.CompilerParams(
            dimension_semantics=("arbitrary",),        # reduction axis
            vmem_limit_bytes=lim(s1)),
    )(Xc, Hc, wT_pad, b_pad)

    # -- stage 2: Z = relu(D_v^{-1} H E), independent per vertex tile -------------------
    out_padded = pl.pallas_call(
        v2v_relu_kernel,
        out_shape=jax.ShapeDtypeStruct((num_v, out_pad), jnp.float32),
        grid=(n_tiles,),
        in_specs=[
            pl.BlockSpec((tv, num_e), lambda i: (i, 0)),
            pl.BlockSpec((out_pad, num_e), lambda i: (0, 0)),
        ],
        out_specs=pl.BlockSpec((tv, out_pad), lambda i: (i, 0)),
        compiler_params=pltpu.CompilerParams(
            dimension_semantics=("parallel",),         # shards tiles across TCs on v7x
            vmem_limit_bytes=lim(s2)),
    )(Hc, eT)

    return out_padded[:, :out_dim]   # drop lane padding (fused under the same jit)


if __name__ == "__main__":
    # Module hyper-params (small, consistent with the forward).
    num_v, input_dim, output_dim = 16, 8, 32
    hg_group = 3
    edge_num = [5, 5, 6]                 # edges per group -> num_e = 16
    num_e = sum(edge_num)

    key = jax.random.PRNGKey(0)
    k_x, k_w, k_b, k_h, k_g = jax.random.split(key, 5)

    X = jax.random.normal(k_x, (num_v, input_dim), dtype=jnp.float32)
    W = jax.random.normal(k_w, (output_dim, input_dim), dtype=jnp.float32) * 0.1  # theta.weight
    b = jax.random.normal(k_b, (output_dim,), dtype=jnp.float32) * 0.1            # theta.bias
    group_weight = jax.random.normal(k_g, (hg_group,), dtype=jnp.float32)         # nn.Parameter(hg_group)

    # Synthetic hypergraph incidence matrix; OR with identity so no empty edge/vertex.
    H_rand = (jax.random.uniform(k_h, (num_v, num_e)) < 0.3).astype(jnp.float32)
    H = jnp.clip(H_rand + jnp.eye(num_v, num_e, dtype=jnp.float32), 0.0, 1.0)

    # Mirror of the (unused) per-edge group weight construction in forward().
    weight = jnp.concatenate(
        [group_weight[i] * jnp.ones((edge_num[i],), jnp.float32) for i in range(hg_group)],
        axis=0,
    )  # not used downstream, exactly as in the PyTorch module

    # Parameters padded once, outside the hot path.
    wT_pad, b_pad = prepare_theta_params(W, b, compute_dtype=jnp.float32)

    # tile_v=8 -> 2-step reduction grid + 2-step parallel grid at this demo size.
    out = con_hypergraph_conv(X, wT_pad, b_pad, H, out_dim=output_dim,
                              tile_v=8, compute_dtype=jnp.float32)
    out = jax.block_until_ready(out)

    # Plain-JAX reference for a sanity check (f32).
    y_ref = X @ W.T + b
    d_e = H.sum(0)
    d_v = H.sum(1)
    e_ref = (H.T @ y_ref) / d_e[:, None]
    z_ref = (H @ e_ref) / d_v[:, None]
    ref = jnp.maximum(z_ref, 0.0)

    assert out.shape == (num_v, output_dim)
    assert jnp.allclose(out, ref, atol=1e-4, rtol=1e-4)
    print("KERNEL_OK")
</pallas_src>

<mosaic_0001>
module attributes {stable_mosaic.version = 11 : i64} {
  func.func @v2v_relu_kernel(%arg0: i32, %arg1: memref<8x16xf32, #tpu.memory_space<vmem>>, %arg2: memref<128x16xf32, #tpu.memory_space<vmem>>, %arg3: memref<8x128xf32, #tpu.memory_space<vmem>>) attributes {dimension_semantics = [#tpu.dimension_semantics<parallel>], iteration_bounds = array<i64: 2>, scalar_prefetch = 0 : i64, scratch_operands = 0 : i64, tpu.core_type = #tpu.core_type<tc>, window_params = [{transform_indices = @transform_0, window_bounds = array<i64: 8, 16>}, {pipeline_mode = #tpu.pipeline_mode<synchronous>, transform_indices = @transform_1, window_bounds = array<i64: 128, 16>}, {transform_indices = @transform_2, window_bounds = array<i64: 8, 128>}]} {
    %c0 = arith.constant 0 : index
    %c0_0 = arith.constant 0 : index
    %0 = vector.load %arg1[%c0, %c0_0] : memref<8x16xf32, #tpu.memory_space<vmem>>, vector<8x16xf32>
    %cst = arith.constant dense<0.000000e+00> : vector<8xf32>
    %1 = vector.multi_reduction <add>, %0, %cst [1] : vector<8x16xf32> to vector<8xf32>
    %2 = vector.shape_cast %1 : vector<8xf32> to vector<8x1xf32>
    %cst_1 = arith.constant 0.000000e+00 : f32
    %3 = vector.broadcast %cst_1 : f32 to vector<8x1xf32>
    %4 = arith.cmpf ogt, %2, %3 : vector<8x1xf32>
    %cst_2 = arith.constant 1.000000e+00 : f32
    %5 = vector.broadcast %cst_2 : f32 to vector<8x1xf32>
    %6 = arith.divf %5, %2 : vector<8x1xf32>
    %cst_3 = arith.constant 0.000000e+00 : f32
    %7 = vector.broadcast %cst_3 : f32 to vector<8x1xf32>
    %8 = arith.select %4, %6, %7 : vector<8x1xi1>, vector<8x1xf32>
    %c0_4 = arith.constant 0 : index
    %c0_5 = arith.constant 0 : index
    %9 = vector.load %arg2[%c0_4, %c0_5] : memref<128x16xf32, #tpu.memory_space<vmem>>, vector<128x16xf32>
    %cst_6 = arith.constant dense<0.000000e+00> : vector<8x128xf32>
    %10 = tpu.matmul %0, %9, %cst_6 {dimension_numbers = #tpu.dot_dimension_numbers<[1], [1], [0], [0], [0, 0, 1, 0], [], []>} : vector<8x16xf32>, vector<128x16xf32>, vector<8x128xf32> -> vector<8x128xf32>
    %11 = vector.broadcast %8 : vector<8x1xf32> to vector<8x128xf32>
    %12 = arith.mulf %10, %11 : vector<8x128xf32>
    %cst_7 = arith.constant 0.000000e+00 : f32
    %13 = vector.broadcast %cst_7 : f32 to vector<8x128xf32>
    %14 = arith.maximumf %12, %13 : vector<8x128xf32>
    %c0_8 = arith.constant 0 : index
    %c0_9 = arith.constant 0 : index
    %15 = vector.load %arg3[%c0_8, %c0_9] : memref<8x128xf32, #tpu.memory_space<vmem>>, vector<8x128xf32>
    tpu.vector_store %arg3[%c0_8, %c0_9], %14 {strides = array<i32>} : memref<8x128xf32, #tpu.memory_space<vmem>>, vector<8x128xf32>,
    return
  }
  func.func @transform_0(%arg0: i32) -> (i32, i32) {
    %c0_i32 = arith.constant 0 : i32
    %c0_i32_0 = arith.constant 0 : i32
    return %arg0, %c0_i32 : i32, i32
  }
  func.func @transform_1(%arg0: i32) -> (i32, i32) {
    %c0_i32 = arith.constant 0 : i32
    %c0_i32_0 = arith.constant 0 : i32
    %c0_i32_1 = arith.constant 0 : i32
    return %c0_i32, %c0_i32_0 : i32, i32
  }
  func.func @transform_2(%arg0: i32) -> (i32, i32) {
    %c0_i32 = arith.constant 0 : i32
    %c0_i32_0 = arith.constant 0 : i32
    return %arg0, %c0_i32 : i32, i32
  }
}

module attributes {stable_mosaic.version = 11 : i64} {
  func.func @edge_accum_kernel(%arg0: i32, %arg1: memref<8x8xf32, #tpu.memory_space<vmem>>, %arg2: memref<8x16xf32, #tpu.memory_space<vmem>>, %arg3: memref<8x128xf32, #tpu.memory_space<vmem>>, %arg4: memref<1x128xf32, #tpu.memory_space<vmem>>, %arg5: memref<128x16xf32, #tpu.memory_space<vmem>>, %arg6: memref<1x16xf32, #tpu.memory_space<vmem>>) attributes {dimension_semantics = [#tpu.dimension_semantics<arbitrary>], iteration_bounds = array<i64: 2>, scalar_prefetch = 0 : i64, scratch_operands = 1 : i64, tpu.core_type = #tpu.core_type<tc>, window_params = [{transform_indices = @transform_0, window_bounds = array<i64: 8, 8>}, {transform_indices = @transform_1, window_bounds = array<i64: 8, 16>}, {pipeline_mode = #tpu.pipeline_mode<synchronous>, transform_indices = @transform_2, window_bounds = array<i64: 8, 128>}, {pipeline_mode = #tpu.pipeline_mode<synchronous>, transform_indices = @transform_3, window_bounds = array<i64: 1, 128>}, {pipeline_mode = #tpu.pipeline_mode<synchronous>, transform_indices = @transform_4, window_bounds = array<i64: 128, 16>}]} {
    %c0_i32 = arith.constant 0 : i32
    %0 = arith.cmpi eq, %arg0, %c0_i32 : i32
    %1 = arith.extui %0 : i1 to i32
    %c0_i32_0 = arith.constant 0 : i32
    %2 = arith.cmpi ne, %1, %c0_i32_0 : i32
    scf.if %2 {
      %cst_19 = arith.constant 0.000000e+00 : f32
      %22 = vector.broadcast %cst_19 : f32 to vector<128x16xf32>
      %c0_20 = arith.constant 0 : index
      %c0_21 = arith.constant 0 : index
      %23 = vector.load %arg5[%c0_20, %c0_21] : memref<128x16xf32, #tpu.memory_space<vmem>>, vector<128x16xf32>
      tpu.vector_store %arg5[%c0_20, %c0_21], %22 {strides = array<i32>} : memref<128x16xf32, #tpu.memory_space<vmem>>, vector<128x16xf32>,
      %cst_22 = arith.constant 0.000000e+00 : f32
      %24 = vector.broadcast %cst_22 : f32 to vector<1x16xf32>
      %c0_23 = arith.constant 0 : index
      %c0_24 = arith.constant 0 : index
      %25 = vector.load %arg6[%c0_23, %c0_24] : memref<1x16xf32, #tpu.memory_space<vmem>>, vector<1x16xf32>
      tpu.vector_store %arg6[%c0_23, %c0_24], %24 {strides = array<i32>} : memref<1x16xf32, #tpu.memory_space<vmem>>, vector<1x16xf32>,
    } else {
    }
    %c0 = arith.constant 0 : index
    %c0_1 = arith.constant 0 : index
    %3 = vector.load %arg2[%c0, %c0_1] : memref<8x16xf32, #tpu.memory_space<vmem>>, vector<8x16xf32>
    %c0_2 = arith.constant 0 : index
    %c0_3 = arith.constant 0 : index
    %4 = vector.load %arg6[%c0_2, %c0_3] : memref<1x16xf32, #tpu.memory_space<vmem>>, vector<1x16xf32>
    %cst = arith.constant dense<0.000000e+00> : vector<16xf32>
    %5 = vector.multi_reduction <add>, %3, %cst [0] : vector<8x16xf32> to vector<16xf32>
    %6 = vector.shape_cast %5 : vector<16xf32> to vector<1x16xf32>
    %7 = arith.addf %4, %6 : vector<1x16xf32>
    %c0_4 = arith.constant 0 : index
    %c0_5 = arith.constant 0 : index
    %8 = vector.load %arg6[%c0_4, %c0_5] : memref<1x16xf32, #tpu.memory_space<vmem>>, vector<1x16xf32>
    tpu.vector_store %arg6[%c0_4, %c0_5], %7 {strides = array<i32>} : memref<1x16xf32, #tpu.memory_space<vmem>>, vector<1x16xf32>,
    %c0_6 = arith.constant 0 : index
    %c0_7 = arith.constant 0 : index
    %9 = vector.load %arg1[%c0_6, %c0_7] : memref<8x8xf32, #tpu.memory_space<vmem>>, vector<8x8xf32>
    %c0_8 = arith.constant 0 : index
    %c0_9 = arith.constant 0 : index
    %10 = vector.load %arg3[%c0_8, %c0_9] : memref<8x128xf32, #tpu.memory_space<vmem>>, vector<8x128xf32>
    %cst_10 = arith.constant dense<0.000000e+00> : vector<8x128xf32>
    %11 = tpu.matmul %9, %10, %cst_10 {dimension_numbers = #tpu.dot_dimension_numbers<[1], [0], [0], [1], [0, 0, 1, 1], [], []>} : vector<8x8xf32>, vector<8x128xf32>, vector<8x128xf32> -> vector<8x128xf32>
    %c0_11 = arith.constant 0 : index
    %c0_12 = arith.constant 0 : index
    %12 = vector.load %arg4[%c0_11, %c0_12] : memref<1x128xf32, #tpu.memory_space<vmem>>, vector<1x128xf32>
    %13 = vector.broadcast %12 : vector<1x128xf32> to vector<8x128xf32>
    %14 = arith.addf %11, %13 : vector<8x128xf32>
    %c0_13 = arith.constant 0 : index
    %c0_14 = arith.constant 0 : index
    %15 = vector.load %arg5[%c0_13, %c0_14] : memref<128x16xf32, #tpu.memory_space<vmem>>, vector<128x16xf32>
    %cst_15 = arith.constant dense<0.000000e+00> : vector<128x16xf32>
    %16 = tpu.matmul %14, %3, %cst_15 {dimension_numbers = #tpu.dot_dimension_numbers<[0], [0], [1], [1], [0, 1, 1, 1], [], []>} : vector<8x128xf32>, vector<8x16xf32>, vector<128x16xf32> -> vector<128x16xf32>
    %17 = arith.addf %15, %16 : vector<128x16xf32>
    %c0_16 = arith.constant 0 : index
    %c0_17 = arith.constant 0 : index
    %18 = vector.load %arg5[%c0_16, %c0_17] : memref<128x16xf32, #tpu.memory_space<vmem>>, vector<128x16xf32>
    tpu.vector_store %arg5[%c0_16, %c0_17], %17 {strides = array<i32>} : memref<128x16xf32, #tpu.memory_space<vmem>>, vector<128x16xf32>,
    %c1_i32 = arith.constant 1 : i32
    %19 = arith.cmpi eq, %arg0, %c1_i32 : i32
    %20 = arith.extui %19 : i1 to i32
    %c0_i32_18 = arith.constant 0 : i32
    %21 = arith.cmpi ne, %20, %c0_i32_18 : i32
    scf.if %21 {
      %c0_19 = arith.constant 0 : index
      %c0_20 = arith.constant 0 : index
      %22 = vector.load %arg6[%c0_19, %c0_20] : memref<1x16xf32, #tpu.memory_space<vmem>>, vector<1x16xf32>
      %cst_21 = arith.constant 0.000000e+00 : f32
      %23 = vector.broadcast %cst_21 : f32 to vector<1x16xf32>
      %24 = arith.cmpf ogt, %22, %23 : vector<1x16xf32>
      %cst_22 = arith.constant 1.000000e+00 : f32
      %25 = vector.broadcast %cst_22 : f32 to vector<1x16xf32>
      %26 = arith.divf %25, %22 : vector<1x16xf32>
      %cst_23 = arith.constant 0.000000e+00 : f32
      %27 = vector.broadcast %cst_23 : f32 to vector<1x16xf32>
      %28 = arith.select %24, %26, %27 : vector<1x16xi1>, vector<1x16xf32>
      %c0_24 = arith.constant 0 : index
      %c0_25 = arith.constant 0 : index
      %29 = vector.load %arg5[%c0_24, %c0_25] : memref<128x16xf32, #tpu.memory_space<vmem>>, vector<128x16xf32>
      %30 = vector.broadcast %28 : vector<1x16xf32> to vector<128x16xf32>
      %31 = arith.mulf %29, %30 : vector<128x16xf32>
      %c0_26 = arith.constant 0 : index
      %c0_27 = arith.constant 0 : index
      %32 = vector.load %arg5[%c0_26, %c0_27] : memref<128x16xf32, #tpu.memory_space<vmem>>, vector<128x16xf32>
      tpu.vector_store %arg5[%c0_26, %c0_27], %31 {strides = array<i32>} : memref<128x16xf32, #tpu.memory_space<vmem>>, vector<128x16xf32>,
    } else {
    }
    return
  }
  func.func @transform_0(%arg0: i32) -> (i32, i32) {
    %c0_i32 = arith.constant 0 : i32
    %c0_i32_0 = arith.constant 0 : i32
    return %arg0, %c0_i32 : i32, i32
  }
  func.func @transform_1(%arg0: i32) -> (i32, i32) {
    %c0_i32 = arith.constant 0 : i32
    %c0_i32_0 = arith.constant 0 : i32
    return %arg0, %c0_i32 : i32, i32
  }
  func.func @transform_2(%arg0: i32) -> (i32, i32) {
    %c0_i32 = arith.constant 0 : i32
    %c0_i32_0 = arith.constant 0 : i32
    %c0_i32_1 = arith.constant 0 : i32
    return %c0_i32, %c0_i32_0 : i32, i32
  }
  func.func @transform_3(%arg0: i32) -> (i32, i32) {
    %c0_i32 = arith.constant 0 : i32
    %c0_i32_0 = arith.constant 0 : i32
    %c0_i32_1 = arith.constant 0 : i32
    return %c0_i32, %c0_i32_0 : i32, i32
  }
  func.func @transform_4(%arg0: i32) -> (i32, i32) {
    %c0_i32 = arith.constant 0 : i32
    %c0_i32_0 = arith.constant 0 : i32
    %c0_i32_1 = arith.constant 0 : i32
    return %c0_i32, %c0_i32_0 : i32, i32
  }
}

</mosaic_0001>

<llo_original>
// kernel: con_hypergraph_conv.2
$region0: #{con_hypergraph_conv.2}
  #allocation0 [shape = 'u32[]', space=smem, size = 0x4, offset = 0x4, fixed_abs, tag = 'smem constant byte address 0x4 - core index']
  #allocation1 [shape = 'u32[144,128]{1,0:T(1,128)}', space=vmem, size = 0x12000, scoped, tag = 'internal scratch']
  #allocation2 [shape = 'f32[1,16]{1,0:T(1,128)}', space=vmem, size = 0x200, scoped, tag = 'scratch operand']
  %s0 = inlined_call_operand.vmem [shape: f32[16,8], index: 0, kind: input, shape index: {}]
  %s1 = inlined_call_operand.vmem [shape: f32[16,16], index: 1, kind: input, shape index: {}]
  %s2 = inlined_call_operand.vmem [shape: f32[8,128], index: 2, kind: input, shape index: {}]
  %s3 = inlined_call_operand.vmem [shape: f32[1,128], index: 3, kind: input, shape index: {}]
  %s4 = inlined_call_operand.vmem [shape: f32[128,16], index: 4, kind: output, shape index: {}]
  %s5 = sld [smem:[#allocation0]]
  $region57: #{con_hypergraph_conv.2} parent=0
    _
  %s7 = ssub.s32 1, %s5
  %s8 = scalar_select 0, %s7, %s5
  loop: start=0, step=1, limit=4
  $region2: #{con_hypergraph_conv.2} parent=0 // loop_pre_header
    _
  $region3: #{con_hypergraph_conv.2} parent=0 // loop_header
    %s10 = sphi 0, %s14
    %p11 = scmp.ge.s32.totalorder %s10, 4
    %s20 = sphi 0, %s22
    %s23 = sphi 0, %s20
    %s24 = sphi 0, %s23
    %s40 = sphi 0, %s24
    %s46 = sphi 0, %s48
    %s49 = sphi 0, %s46
    %s50 = sphi 0, %s49
    %s66 = sphi 0, %s50
    %s70 = sphi 0, %s70
    %s72 = sphi 0, %s70
    %s73 = sphi 0, %s72
    %s87 = sphi 0, %s73
    %s91 = sphi 0, %s91
    %s93 = sphi 0, %s91
    %s94 = sphi 0, %s93
    %s108 = sphi 0, %s94
    %s112 = sphi 0, %s112
    %s114 = sphi 0, %s112
    %s115 = sphi 0, %s114
    %s129 = sphi 0, %s115
  $region4: #{con_hypergraph_conv.2} parent=0 // loop_header_branch
    %13 = sbr.rel (%p11) target = $region8
  $region5: #{con_hypergraph_conv.2} parent=0 // loop_body
    %s15 = ssub.s32 %s10, 1
    %s16 = ssub.s32 %s10, 2
    %s17 = sadd.s32 %s10, 1
    %s18 = ssub.s32 %s10, %s17
    %p19 = scmp.eq.s32.totalorder %s18, 0
    %s21 = sadd.s32 %s20, 1
    %s22 = scalar_select %p19, %s20, %s21
    %p25 = pneg %p19
    %p26 = scmp.eq.s32.totalorder %s10, 1
    %p27 = por %p25, %p26
    %p28 = scmp.ne.s32.totalorder %s20, %s23
    %p29 = scmp.eq.s32.totalorder %s10, 0
    %p30 = por %p28, %p29
    %p31 = scmp.ne.s32.totalorder %s20, %s23
    %p32 = scmp.eq.s32.totalorder %s15, 1
    %p33 = por %p31, %p32
    %p34 = scmp.ne.s32.totalorder %s23, %s24
    %p35 = scmp.eq.s32.totalorder %s15, 0
    %p36 = por %p34, %p35
    %p37 = scmp.ne.s32.totalorder %s23, %s24
    %p38 = scmp.eq.s32.totalorder %s16, 1
    %p39 = por %p37, %p38
    %p41 = scmp.ne.s32.totalorder %s24, %s40
    %p42 = scmp.eq.s32.totalorder %s16, 0
    %p43 = por %p41, %p42
    %s44 = ssub.s32 %s10, %s17
    %p45 = scmp.eq.s32.totalorder %s44, 0
    %s47 = sadd.s32 %s46, 1
    %s48 = scalar_select %p45, %s46, %s47
    %p51 = pneg %p45
    %p52 = scmp.eq.s32.totalorder %s10, 1
    %p53 = por %p51, %p52
    %p54 = scmp.ne.s32.totalorder %s46, %s49
    %p55 = scmp.eq.s32.totalorder %s10, 0
    %p56 = por %p54, %p55
    %p57 = scmp.ne.s32.totalorder %s46, %s49
    %p58 = scmp.eq.s32.totalorder %s15, 1
    %p59 = por %p57, %p58
    %p60 = scmp.ne.s32.totalorder %s49, %s50
    %p61 = scmp.eq.s32.totalorder %s15, 0
    %p62 = por %p60, %p61
    %p63 = scmp.ne.s32.totalorder %s49, %s50
    %p64 = scmp.eq.s32.totalorder %s16, 1
    %p65 = por %p63, %p64
    %p67 = scmp.ne.s32.totalorder %s50, %s66
    %p68 = scmp.eq.s32.totalorder %s16, 0
    %p69 = por %p67, %p68
    %s71 = sadd.s32 %s70, 1
    %p74 = scmp.eq.s32.totalorder %s10, 1
    %p75 = scmp.ne.s32.totalorder %s70, %s72
    %p76 = scmp.eq.s32.totalorder %s10, 0
    %p77 = por %p75, %p76
    %p78 = scmp.ne.s32.totalorder %s70, %s72
    %p79 = scmp.eq.s32.totalorder %s15, 1
    %p80 = por %p78, %p79
    %p81 = scmp.ne.s32.totalorder %s72, %s73
    %p82 = scmp.eq.s32.totalorder %s15, 0
    %p83 = por %p81, %p82
    %p84 = scmp.ne.s32.totalorder %s72, %s73
    %p85 = scmp.eq.s32.totalorder %s16, 1
    %p86 = por %p84, %p85
    %p88 = scmp.ne.s32.totalorder %s73, %s87
    %p89 = scmp.eq.s32.totalorder %s16, 0
    %p90 = por %p88, %p89
    %s92 = sadd.s32 %s91, 1
    %p95 = scmp.eq.s32.totalorder %s10, 1
    %p96 = scmp.ne.s32.totalorder %s91, %s93
    %p97 = scmp.eq.s32.totalorder %s10, 0
    %p98 = por %p96, %p97
    %p99 = scmp.ne.s32.totalorder %s91, %s93
    %p100 = scmp.eq.s32.totalorder %s15, 1
    %p101 = por %p99, %p100
    %p102 = scmp.ne.s32.totalorder %s93, %s94
    %p103 = scmp.eq.s32.totalorder %s15, 0
    %p104 = por %p102, %p103
    %p105 = scmp.ne.s32.totalorder %s93, %s94
    %p106 = scmp.eq.s32.totalorder %s16, 1
    %p107 = por %p105, %p106
    %p109 = scmp.ne.s32.totalorder %s94, %s108
    %p110 = scmp.eq.s32.totalorder %s16, 0
    %p111 = por %p109, %p110
    %s113 = sadd.s32 %s112, 1
    %p116 = scmp.eq.s32.totalorder %s10, 1
    %p117 = scmp.ne.s32.totalorder %s112, %s114
    %p118 = scmp.eq.s32.totalorder %s10, 0
    %p119 = por %p117, %p118
    %p120 = scmp.ne.s32.totalorder %s112, %s114
    %p121 = scmp.eq.s32.totalorder %s15, 1
    %p122 = por %p120, %p121
    %p123 = scmp.ne.s32.totalorder %s114, %s115
    %p124 = scmp.eq.s32.totalorder %s15, 0
    %p125 = por %p123, %p124
    %p126 = scmp.ne.s32.totalorder %s114, %s115
    %p127 = scmp.eq.s32.totalorder %s16, 1
    %p128 = por %p126, %p127
    %p130 = scmp.ne.s32.totalorder %s115, %s129
    %p131 = scmp.eq.s32.totalorder %s16, 0
    %p132 = por %p130, %p131
    %p133 = scmp.le.s32.totalorder 1, %s10
    %p134 = scmp.lt.s32.totalorder %s10, 3
    %p135 = pnand %p133, %p134
    %p136 = pneg %p135
    // Predicated region
    $region9: #{con_hypergraph_conv.2} parent=5 // pred_check
      _
    $region10: #{con_hypergraph_conv.2} parent=5 // pred_check_branch
      %138 = sbr.rel (%p135) target = $region12
    $region11: #{con_hypergraph_conv.2} parent=5 // pred_region
      %s139 = ssub.s32 %s10, 1
      // Predicated region
      $region13: #{con_hypergraph_conv.2} parent=11 // pred_check
        %p140 = pneg %p83
      $region14: #{con_hypergraph_conv.2} parent=11 // pred_check_branch
        %142 = sbr.rel (%p140) target = $region16
      $region15: #{con_hypergraph_conv.2} parent=11 // pred_region
        _
      $region16: #{con_hypergraph_conv.2} parent=11 // pred_fallthru
        _
      // Predicated region
      $region17: #{con_hypergraph_conv.2} parent=11 // pred_check
        %p143 = pneg %p104
      $region18: #{con_hypergraph_conv.2} parent=11 // pred_check_branch
        %145 = sbr.rel (%p143) target = $region20
      $region19: #{con_hypergraph_conv.2} parent=11 // pred_region
        _
      $region20: #{con_hypergraph_conv.2} parent=11 // pred_fallthru
        _
    $region12: #{con_hypergraph_conv.2} parent=5 // pred_fallthru
      _
    %p146 = scmp.lt.s32.totalorder %s10, 2
    // Predicated region
    $region21: #{con_hypergraph_conv.2} parent=5 // pred_check
      %p147 = pneg %p146
    $region22: #{con_hypergraph_conv.2} parent=5 // pred_check_branch
      %149 = sbr.rel (%p147) target = $region24
    $region23: #{con_hypergraph_conv.2} parent=5 // pred_region
      // Predicated region
      $region25: #{con_hypergraph_conv.2} parent=23 // pred_check
        %p150 = pneg %p30
      $region26: #{con_hypergraph_conv.2} parent=23 // pred_check_branch
        %152 = sbr.rel (%p150) target = $region28
      $region27: #{con_hypergraph_conv.2} parent=23 // pred_region
        %p153 = scmp.lt.s32.totalorder %s10, 1
        %s154 = scalar_select %p153, %s10, 1
        %s155 = smul.addr %s154, 8
        %s156 = scalar_lea.vmem %s0, %s155
      $region28: #{con_hypergraph_conv.2} parent=23 // pred_fallthru
        _
      // Predicated region
      $region29: #{con_hypergraph_conv.2} parent=23 // pred_check
        %p157 = pneg %p56
      $region30: #{con_hypergraph_conv.2} parent=23 // pred_check_branch
        %159 = sbr.rel (%p157) target = $region32
      $region31: #{con_hypergraph_conv.2} parent=23 // pred_region
        %p160 = scmp.lt.s32.totalorder %s10, 1
        %s161 = scalar_select %p160, %s10, 1
        %s162 = smul.addr %s161, 8
        %s163 = scalar_lea.vmem %s1, %s162
      $region32: #{con_hypergraph_conv.2} parent=23 // pred_fallthru
        _
    $region24: #{con_hypergraph_conv.2} parent=5 // pred_fallthru
      _
    %p164 = scmp.le.s32.totalorder 1, %s10
    %p165 = scmp.lt.s32.totalorder %s10, 3
    %p166 = pnand %p164, %p165
    %p167 = pneg %p166
    // Predicated region
    $region33: #{con_hypergraph_conv.2} parent=5 // pred_check
      _
    $region34: #{con_hypergraph_conv.2} parent=5 // pred_check_branch
      %169 = sbr.rel (%p166) target = $region36
    $region35: #{con_hypergraph_conv.2} parent=5 // pred_region
      %s170 = ssub.s32 %s10, 1
      %p171 = scmp.lt.s32.totalorder %s15, 1
      %s172 = scalar_select %p171, %s15, 1
      %s173 = smul.addr %s172, 8
      %s174 = scalar_lea.vmem %s0, %s173
      %p175 = pneg %p36
      %p176 = pneg %p33
      %p177 = scmp.lt.s32.totalorder %s15, 1
      %s178 = scalar_select %p177, %s15, 1
      %s179 = smul.addr %s178, 8
      %s180 = scalar_lea.vmem %s1, %s179
      %p181 = pneg %p62
      %p182 = pneg %p59
      %p183 = pneg %p83
      %p184 = pneg %p80
      %p185 = pneg %p104
      %p186 = pneg %p101
      %p187 = pneg %p125
      %p188 = pneg %p122
      %p189 = scmp.lt.s32.totalorder %s15, 1
      %s190 = scalar_select %p189, %s15, 1
      %s191 = smul.addr %s190, 8
      %s192 = scalar_lea.vmem %s0, %s191
      %p193 = scmp.lt.s32.totalorder %s15, 1
      %s194 = scalar_select %p193, %s15, 1
      %s195 = smul.addr %s194, 8
      %s196 = scalar_lea.vmem %s1, %s195
      %p197 = scmp.eq.s32.totalorder %s15, 0
      // Predicated region
      $region37: #{con_hypergraph_conv.2} parent=35 // pred_check
        %p198 = pneg %p197
      $region38: #{con_hypergraph_conv.2} parent=35 // pred_check_branch
        %200 = sbr.rel (%p198) target = $region40
      $region39: #{con_hypergraph_conv.2} parent=35 // pred_region
        %vm201 = vcmask 130048
        %202 = vst.msk [vmem:[%s4] sm:$0xff] %vm201, 0.0
        %203 = vst.msk [vmem:[%s4 + $0x8] sm:$0xff] %vm201, 0.0
        %204 = vst.msk [vmem:[%s4 + $0x10] sm:$0xff] %vm201, 0.0
        %205 = vst.msk [vmem:[%s4 + $0x18] sm:$0xff] %vm201, 0.0
        %206 = vst.msk [vmem:[%s4 + $0x20] sm:$0xff] %vm201, 0.0
        %207 = vst.msk [vmem:[%s4 + $0x28] sm:$0xff] %vm201, 0.0
        %208 = vst.msk [vmem:[%s4 + $0x30] sm:$0xff] %vm201, 0.0
        %209 = vst.msk [vmem:[%s4 + $0x38] sm:$0xff] %vm201, 0.0
        %210 = vst.msk [vmem:[%s4 + $0x40] sm:$0xff] %vm201, 0.0
        %211 = vst.msk [vmem:[%s4 + $0x48] sm:$0xff] %vm201, 0.0
        %212 = vst.msk [vmem:[%s4 + $0x50] sm:$0xff] %vm201, 0.0
        %213 = vst.msk [vmem:[%s4 + $0x58] sm:$0xff] %vm201, 0.0
        %214 = vst.msk [vmem:[%s4 + $0x60] sm:$0xff] %vm201, 0.0
        %215 = vst.msk [vmem:[%s4 + $0x68] sm:$0xff] %vm201, 0.0
        %216 = vst.msk [vmem:[%s4 + $0x70] sm:$0xff] %vm201, 0.0
        %217 = vst.msk [vmem:[%s4 + $0x78] sm:$0xff] %vm201, 0.0
        %vm218 = vcmask 122880
        %219 = vst.msk [vmem:[#allocation2] sm:$0x1] %vm218, 0.0
      $region40: #{con_hypergraph_conv.2} parent=35 // pred_fallthru
        _
      %v220 = vld [vmem:[%s196] sm:$0xff]
      %v221 = vld [vmem:[#allocation2] sm:$0x1]
      %vm222 = vcmask 130048
      %v223 = vsel %vm222, %v220, 0.0
      %v224 = vrot.slane %v223, 4
      %v225 = vadd.f32 %v223, %v224
      %v226 = vrot.slane %v225, 2
      %v227 = vadd.f32 %v225, %v226
      %v228 = vrot.slane %v227, 1
      %v229 = vadd.f32 %v227, %v228
      %v230 = vadd.f32 %v221, %v229
      %vm231 = vcmask 122880
      %232 = vst.msk [vmem:[#allocation2] sm:$0x1] %vm231, %v230
      %v233 = vld [vmem:[%s192] sm:$0xff]
      %v234 = vld [vmem:[%s2] sm:$0xff]
      %v235 = vld [vmem:[%s3] sm:$0x1]
      %v237 = vlaneseq
      %v238 = vshrl.u32 %v237, 7
      %v239 = vsub.s32 0, %v238
      %v240 = vrot.slane %v235, %v239
      %vm242 = vcmask 64512
      %v244 = vsel %vm242, %v233, 0
      %246 = vmatprep.subr.mxu0 0.0
      %247 = vmatpush1.msra.mxu0 0.0
      %248 = vmatprep.subr.mxu0 0.0
      %249 = vmatpush1.msra.mxu0 0.0
      %250 = vmatprep.subr.mxu0 0.0
      %251 = vmatpush1.msra.mxu0 0.0
      %252 = vmatprep.subr.mxu0 0.0
      %253 = vmatpush1.msra.mxu0 0.0
      %254 = vmatprep.subr.mxu0 0.0
      %255 = vmatpush1.msra.mxu0 0.0
      %256 = vmatprep.subr.mxu0 0.0
      %257 = vmatpush1.msra.mxu0 0.0
      %258 = vmatprep.subr.mxu0 0.0
      %259 = vmatpush1.msra.mxu0 0.0
      %260 = vmatprep.subr.mxu0 0.0
      %261 = vmatpush1.msra.mxu0 0.0
      %262 = vmatprep.subr.mxu0 0.0
      %263 = vmatpush1.msra.mxu0 0.0
      %264 = vmatprep.subr.mxu0 0.0
      %265 = vmatpush1.msra.mxu0 0.0
      %266 = vmatprep.subr.mxu0 0.0
      %267 = vmatpush1.msra.mxu0 0.0
      %268 = vmatprep.subr.mxu0 0.0
      %269 = vmatpush1.msra.mxu0 0.0
      %270 = vmatprep.subr.mxu0 0.0
      %271 = vmatpush1.msra.mxu0 0.0
      %272 = vmatprep.subr.mxu0 0.0
      %273 = vmatpush1.msra.mxu0 0.0
      %274 = vmatprep.subr.mxu0 0.0
      %275 = vmatpush1.msra.mxu0 0.0
      %276 = vmatprep.subr.mxu0 0.0
      %277 = vmatpush1.msra.mxu0 %v234
      %278 = vmatprep.subr.mxu0 0.0
      %279 = vmatpush2.msra.mxu0 0.0
      %280 = vmatprep.subr.mxu0 0.0
      %281 = vmatpush2.msra.mxu0 0.0
      %282 = vmatprep.subr.mxu0 0.0
      %283 = vmatpush2.msra.mxu0 0.0
      %284 = vmatprep.subr.mxu0 0.0
      %285 = vmatpush2.msra.mxu0 0.0
      %286 = vmatprep.subr.mxu0 0.0
      %287 = vmatpush2.msra.mxu0 0.0
      %288 = vmatprep.subr.mxu0 0.0
      %289 = vmatpush2.msra.mxu0 0.0
      %290 = vmatprep.subr.mxu0 0.0
      %291 = vmatpush2.msra.mxu0 0.0
      %292 = vmatprep.subr.mxu0 0.0
      %293 = vmatpush2.msra.mxu0 0.0
      %294 = vmatprep.subr.mxu0 0.0
      %295 = vmatpush2.msra.mxu0 0.0
      %296 = vmatprep.subr.mxu0 0.0
      %297 = vmatpush2.msra.mxu0 0.0
      %298 = vmatprep.subr.mxu0 0.0
      %299 = vmatpush2.msra.mxu0 0.0
      %300 = vmatprep.subr.mxu0 0.0
      %301 = vmatpush2.msra.mxu0 0.0
      %302 = vmatprep.subr.mxu0 0.0
      %303 = vmatpush2.msra.mxu0 0.0
      %304 = vmatprep.subr.mxu0 0.0
      %305 = vmatpush2.msra.mxu0 0.0
      %306 = vmatprep.subr.mxu0 0.0
      %307 = vmatpush2.msra.mxu0 0.0
      %308 = vmatprep.subr.mxu0 0.0
      %309 = vmatpush2.msra.mxu0 0.0
      %310 = vmatprep.mubr.f32.mxu0 0.0
      %311 = vmatmul.mubr.f32.gmra.mxu0 %v244
      %v312 = vpop.f32.mrf.mxu0
      %v313 = vadd.f32 %v240, %v312
      %v314 = vpop.f32.mrf.mxu0
      %315 = vdwg.mxu0
      %v316 = vld [vmem:[%s4] sm:$0xff]
      %v317 = vld [vmem:[%s4 + $0x8] sm:$0xff]
      %v318 = vld [vmem:[%s4 + $0x10] sm:$0xff]
      %v319 = vld [vmem:[%s4 + $0x18] sm:$0xff]
      %v320 = vld [vmem:[%s4 + $0x20] sm:$0xff]
      %v321 = vld [vmem:[%s4 + $0x28] sm:$0xff]
      %v322 = vld [vmem:[%s4 + $0x30] sm:$0xff]
      %v323 = vld [vmem:[%s4 + $0x38] sm:$0xff]
      %v324 = vld [vmem:[%s4 + $0x40] sm:$0xff]
      %v325 = vld [vmem:[%s4 + $0x48] sm:$0xff]
      %v326 = vld [vmem:[%s4 + $0x50] sm:$0xff]
      %v327 = vld [vmem:[%s4 + $0x58] sm:$0xff]
      %v328 = vld [vmem:[%s4 + $0x60] sm:$0xff]
      %v329 = vld [vmem:[%s4 + $0x68] sm:$0xff]
      %v330 = vld [vmem:[%s4 + $0x70] sm:$0xff]
      %v331 = vld [vmem:[%s4 + $0x78] sm:$0xff]
      %332 = vxpose.xlu0.b32.start [1/16] %v313, 128
      %333 = vxpose.xlu0.b32.cont [2/16] 0.0, 128
      %334 = vxpose.xlu0.b32.cont [3/16] 0.0, 128
      %335 = vxpose.xlu0.b32.cont [4/16] 0.0, 128
      %336 = vxpose.xlu0.b32.cont [5/16] 0.0, 128
      %337 = vxpose.xlu0.b32.cont [6/16] 0.0, 128
      %338 = vxpose.xlu0.b32.cont [7/16] 0.0, 128
      %339 = vxpose.xlu0.b32.cont [8/16] 0.0, 128
      %340 = vxpose.xlu0.b32.cont [9/16] 0.0, 128
      %341 = vxpose.xlu0.b32.cont [10/16] 0.0, 128
      %342 = vxpose.xlu0.b32.cont [11/16] 0.0, 128
      %343 = vxpose.xlu0.b32.cont [12/16] 0.0, 128
      %344 = vxpose.xlu0.b32.cont [13/16] 0.0, 128
      %345 = vxpose.xlu0.b32.cont [14/16] 0.0, 128
      %346 = vxpose.xlu0.b32.cont [15/16] 0.0, 128
      %347 = vxpose.xlu0.b32.end [16/16] 0.0, 128
      %v348 = vpop.trf.xlu0
      %v349 = vpop.trf.xlu0
      %v350 = vpop.trf.xlu0
      %v351 = vpop.trf.xlu0
      %v352 = vpop.trf.xlu0
      %v353 = vpop.trf.xlu0
      %v354 = vpop.trf.xlu0
      %v355 = vpop.trf.xlu0
      %v356 = vpop.trf.xlu0
      %v357 = vpop.trf.xlu0
      %v358 = vpop.trf.xlu0
      %v359 = vpop.trf.xlu0
      %v360 = vpop.trf.xlu0
      %v361 = vpop.trf.xlu0
      %v362 = vpop.trf.xlu0
      %v363 = vpop.trf.xlu0
      %v365 = vsel %vm242, %v348, 0
      %v368 = vsel %vm242, %v349, 0
      %v371 = vsel %vm242, %v350, 0
      %v374 = vsel %vm242, %v351, 0
      %v377 = vsel %vm242, %v352, 0
      %v380 = vsel %vm242, %v353, 0
      %v383 = vsel %vm242, %v354, 0
      %v386 = vsel %vm242, %v355, 0
      %v389 = vsel %vm242, %v356, 0
      %v392 = vsel %vm242, %v357, 0
      %v395 = vsel %vm242, %v358, 0
      %v398 = vsel %vm242, %v359, 0
      %v401 = vsel %vm242, %v360, 0
      %v404 = vsel %vm242, %v361, 0
      %v407 = vsel %vm242, %v362, 0
      %v410 = vsel %vm242, %v363, 0
      %412 = vmatprep.subr.mxu0 0.0
      %413 = vmatpush1.msra.mxu0 0.0
      %414 = vmatprep.subr.mxu0 0.0
      %415 = vmatpush1.msra.mxu0 0.0
      %416 = vmatprep.subr.mxu0 0.0
      %417 = vmatpush1.msra.mxu0 0.0
      %418 = vmatprep.subr.mxu0 0.0
      %419 = vmatpush1.msra.mxu0 0.0
      %420 = vmatprep.subr.mxu0 0.0
      %421 = vmatpush1.msra.mxu0 0.0
      %422 = vmatprep.subr.mxu0 0.0
      %423 = vmatpush1.msra.mxu0 0.0
      %424 = vmatprep.subr.mxu0 0.0
      %425 = vmatpush1.msra.mxu0 0.0
      %426 = vmatprep.subr.mxu0 0.0
      %427 = vmatpush1.msra.mxu0 0.0
      %428 = vmatprep.subr.mxu0 0.0
      %429 = vmatpush1.msra.mxu0 0.0
      %430 = vmatprep.subr.mxu0 0.0
      %431 = vmatpush1.msra.mxu0 0.0
      %432 = vmatprep.subr.mxu0 0.0
      %433 = vmatpush1.msra.mxu0 0.0
      %434 = vmatprep.subr.mxu0 0.0
      %435 = vmatpush1.msra.mxu0 0.0
      %436 = vmatprep.subr.mxu0 0.0
      %437 = vmatpush1.msra.mxu0 0.0
      %438 = vmatprep.subr.mxu0 0.0
      %439 = vmatpush1.msra.mxu0 0.0
      %440 = vmatprep.subr.mxu0 0.0
      %441 = vmatpush1.msra.mxu0 0.0
      %442 = vmatprep.subr.mxu0 0.0
      %443 = vmatpush1.msra.mxu0 %v220
      %444 = vmatprep.subr.mxu0 0.0
      %445 = vmatpush2.msra.mxu0 0.0
      %446 = vmatprep.subr.mxu0 0.0
      %447 = vmatpush2.msra.mxu0 0.0
      %448 = vmatprep.subr.mxu0 0.0
      %449 = vmatpush2.msra.mxu0 0.0
      %450 = vmatprep.subr.mxu0 0.0
      %451 = vmatpush2.msra.mxu0 0.0
      %452 = vmatprep.subr.mxu0 0.0
      %453 = vmatpush2.msra.mxu0 0.0
      %454 = vmatprep.subr.mxu0 0.0
      %455 = vmatpush2.msra.mxu0 0.0
      %456 = vmatprep.subr.mxu0 0.0
      %457 = vmatpush2.msra.mxu0 0.0
      %458 = vmatprep.subr.mxu0 0.0
      %459 = vmatpush2.msra.mxu0 0.0
      %460 = vmatprep.subr.mxu0 0.0
      %461 = vmatpush2.msra.mxu0 0.0
      %462 = vmatprep.subr.mxu0 0.0
      %463 = vmatpush2.msra.mxu0 0.0
      %464 = vmatprep.subr.mxu0 0.0
      %465 = vmatpush2.msra.mxu0 0.0
      %466 = vmatprep.subr.mxu0 0.0
      %467 = vmatpush2.msra.mxu0 0.0
      %468 = vmatprep.subr.mxu0 0.0
      %469 = vmatpush2.msra.mxu0 0.0
      %470 = vmatprep.subr.mxu0 0.0
      %471 = vmatpush2.msra.mxu0 0.0
      %472 = vmatprep.subr.mxu0 0.0
      %473 = vmatpush2.msra.mxu0 0.0
      %474 = vmatprep.subr.mxu0 0.0
      %475 = vmatpush2.msra.mxu0 0.0
      %476 = vmatprep.mubr.f32.mxu0 0.0
      %477 = vmatmul.mubr.f32.gmra.mxu0 %v365
      %v478 = vpop.f32.mrf.mxu0
      %v479 = vadd.f32 0.0, %v478
      %v480 = vpop.f32.mrf.mxu0
      %481 = vmatprep.mubr.f32.mxu0 0.0
      %482 = vmatmul.mubr.f32.gmra.mxu0 %v368
      %v483 = vpop.f32.mrf.mxu0
      %v484 = vadd.f32 0.0, %v483
      %v485 = vpop.f32.mrf.mxu0
      %486 = vmatprep.mubr.f32.mxu0 0.0
      %487 = vmatmul.mubr.f32.gmra.mxu0 %v371
      %v488 = vpop.f32.mrf.mxu0
      %v489 = vadd.f32 0.0, %v488
      %v490 = vpop.f32.mrf.mxu0
      %491 = vmatprep.mubr.f32.mxu0 0.0
      %492 = vmatmul.mubr.f32.gmra.mxu0 %v374
      %v493 = vpop.f32.mrf.mxu0
      %v494 = vadd.f32 0.0, %v493
      %v495 = vpop.f32.mrf.mxu0
      %496 = vmatprep.mubr.f32.mxu0 0.0
      %497 = vmatmul.mubr.f32.gmra.mxu0 %v377
      %v498 = vpop.f32.mrf.mxu0
      %v499 = vadd.f32 0.0, %v498
      %v500 = vpop.f32.mrf.mxu0
      %501 = vmatprep.mubr.f32.mxu0 0.0
      %502 = vmatmul.mubr.f32.gmra.mxu0 %v380
      %v503 = vpop.f32.mrf.mxu0
      %v504 = vadd.f32 0.0, %v503
      %v505 = vpop.f32.mrf.mxu0
      %506 = vmatprep.mubr.f32.mxu0 0.0
      %507 = vmatmul.mubr.f32.gmra.mxu0 %v383
      %v508 = vpop.f32.mrf.mxu0
      %v509 = vadd.f32 0.0, %v508
      %v510 = vpop.f32.mrf.mxu0
      %511 = vmatprep.mubr.f32.mxu0 0.0
      %512 = vmatmul.mubr.f32.gmra.mxu0 %v386
      %v513 = vpop.f32.mrf.mxu0
      %v514 = vadd.f32 0.0, %v513
      %v515 = vpop.f32.mrf.mxu0
      %516 = vmatprep.mubr.f32.mxu0 0.0
      %517 = vmatmul.mubr.f32.gmra.mxu0 %v389
      %v518 = vpop.f32.mrf.mxu0
      %v519 = vadd.f32 0.0, %v518
      %v520 = vpop.f32.mrf.mxu0
      %521 = vmatprep.mubr.f32.mxu0 0.0
      %522 = vmatmul.mubr.f32.gmra.mxu0 %v392
      %v523 = vpop.f32.mrf.mxu0
      %v524 = vadd.f32 0.0, %v523
      %v525 = vpop.f32.mrf.mxu0
      %526 = vmatprep.mubr.f32.mxu0 0.0
      %527 = vmatmul.mubr.f32.gmra.mxu0 %v395
      %v528 = vpop.f32.mrf.mxu0
      %v529 = vadd.f32 0.0, %v528
      %v530 = vpop.f32.mrf.mxu0
      %531 = vmatprep.mubr.f32.mxu0 0.0
      %532 = vmatmul.mubr.f32.gmra.mxu0 %v398
      %v533 = vpop.f32.mrf.mxu0
      %v534 = vadd.f32 0.0, %v533
      %v535 = vpop.f32.mrf.mxu0
      %536 = vmatprep.mubr.f32.mxu0 0.0
      %537 = vmatmul.mubr.f32.gmra.mxu0 %v401
      %v538 = vpop.f32.mrf.mxu0
      %v539 = vadd.f32 0.0, %v538
      %v540 = vpop.f32.mrf.mxu0
      %541 = vmatprep.mubr.f32.mxu0 0.0
      %542 = vmatmul.mubr.f32.gmra.mxu0 %v404
      %v543 = vpop.f32.mrf.mxu0
      %v544 = vadd.f32 0.0, %v543
      %v545 = vpop.f32.mrf.mxu0
      %546 = vmatprep.mubr.f32.mxu0 0.0
      %547 = vmatmul.mubr.f32.gmra.mxu0 %v407
      %v548 = vpop.f32.mrf.mxu0
      %v549 = vadd.f32 0.0, %v548
      %v550 = vpop.f32.mrf.mxu0
      %551 = vmatprep.mubr.f32.mxu0 0.0
      %552 = vmatmul.mubr.f32.gmra.mxu0 %v410
      %v553 = vpop.f32.mrf.mxu0
      %v554 = vadd.f32 0.0, %v553
      %v555 = vpop.f32.mrf.mxu0
      %556 = vdwg.mxu0
      %v557 = vadd.f32 %v316, %v479
      %v558 = vadd.f32 %v317, %v484
      %v559 = vadd.f32 %v318, %v489
      %v560 = vadd.f32 %v319, %v494
      %v561 = vadd.f32 %v320, %v499
      %v562 = vadd.f32 %v321, %v504
      %v563 = vadd.f32 %v322, %v509
      %v564 = vadd.f32 %v323, %v514
      %v565 = vadd.f32 %v324, %v519
      %v566 = vadd.f32 %v325, %v524
      %v567 = vadd.f32 %v326, %v529
      %v568 = vadd.f32 %v327, %v534
      %v569 = vadd.f32 %v328, %v539
      %v570 = vadd.f32 %v329, %v544
      %v571 = vadd.f32 %v330, %v549
      %v572 = vadd.f32 %v331, %v554
      %573 = vst.msk [vmem:[%s4] sm:$0xff] %vm222, %v557
      %574 = vst.msk [vmem:[%s4 + $0x8] sm:$0xff] %vm222, %v558
      %575 = vst.msk [vmem:[%s4 + $0x10] sm:$0xff] %vm222, %v559
      %576 = vst.msk [vmem:[%s4 + $0x18] sm:$0xff] %vm222, %v560
      %577 = vst.msk [vmem:[%s4 + $0x20] sm:$0xff] %vm222, %v561
      %578 = vst.msk [vmem:[%s4 + $0x28] sm:$0xff] %vm222, %v562
      %579 = vst.msk [vmem:[%s4 + $0x30] sm:$0xff] %vm222, %v563
      %580 = vst.msk [vmem:[%s4 + $0x38] sm:$0xff] %vm222, %v564
      %581 = vst.msk [vmem:[%s4 + $0x40] sm:$0xff] %vm222, %v565
      %582 = vst.msk [vmem:[%s4 + $0x48] sm:$0xff] %vm222, %v566
      %583 = vst.msk [vmem:[%s4 + $0x50] sm:$0xff] %vm222, %v567
      %584 = vst.msk [vmem:[%s4 + $0x58] sm:$0xff] %vm222, %v568
      %585 = vst.msk [vmem:[%s4 + $0x60] sm:$0xff] %vm222, %v569
      %586 = vst.msk [vmem:[%s4 + $0x68] sm:$0xff] %vm222, %v570
      %587 = vst.msk [vmem:[%s4 + $0x70] sm:$0xff] %vm222, %v571
      %588 = vst.msk [vmem:[%s4 + $0x78] sm:$0xff] %vm222, %v572
      %p589 = scmp.eq.s32.totalorder %s15, 1
      // Predicated region
      $region41: #{con_hypergraph_conv.2} parent=35 // pred_check
        %p590 = pneg %p589
      $region42: #{con_hypergraph_conv.2} parent=35 // pred_check_branch
        %592 = sbr.rel (%p590) target = $region44
      $region43: #{con_hypergraph_conv.2} parent=35 // pred_region
        %v593 = vld [vmem:[#allocation2] sm:$0x1]
        %vm594 = vcmp.gt.f32.partialorder %v593, 0.0
        %v595 = vrcp.pop %v593
        %v596 = vmul.f32 1.0, %v595
        %v597 = vsel %vm594, %v596, 0.0
        %v598 = vld [vmem:[%s4] sm:$0xff]
        %v599 = vld [vmem:[%s4 + $0x8] sm:$0xff]
        %v600 = vld [vmem:[%s4 + $0x10] sm:$0xff]
        %v601 = vld [vmem:[%s4 + $0x18] sm:$0xff]
        %v602 = vld [vmem:[%s4 + $0x20] sm:$0xff]
        %v603 = vld [vmem:[%s4 + $0x28] sm:$0xff]
        %v604 = vld [vmem:[%s4 + $0x30] sm:$0xff]
        %v605 = vld [vmem:[%s4 + $0x38] sm:$0xff]
        %v606 = vld [vmem:[%s4 + $0x40] sm:$0xff]
        %v607 = vld [vmem:[%s4 + $0x48] sm:$0xff]
        %v608 = vld [vmem:[%s4 + $0x50] sm:$0xff]
        %v609 = vld [vmem:[%s4 + $0x58] sm:$0xff]
        %v610 = vld [vmem:[%s4 + $0x60] sm:$0xff]
        %v611 = vld [vmem:[%s4 + $0x68] sm:$0xff]
        %v612 = vld [vmem:[%s4 + $0x70] sm:$0xff]
        %v613 = vld [vmem:[%s4 + $0x78] sm:$0xff]
        %v615 = vlaneseq
        %v616 = vshrl.u32 %v615, 7
        %v617 = vsub.s32 0, %v616
        %v618 = vrot.slane %v597, %v617
        %v620 = vmul.f32 %v598, %v618
        %v621 = vmul.f32 %v599, %v618
        %v622 = vmul.f32 %v600, %v618
        %v623 = vmul.f32 %v601, %v618
        %v624 = vmul.f32 %v602, %v618
        %v625 = vmul.f32 %v603, %v618
        %v626 = vmul.f32 %v604, %v618
        %v627 = vmul.f32 %v605, %v618
        %v628 = vmul.f32 %v606, %v618
        %v629 = vmul.f32 %v607, %v618
        %v630 = vmul.f32 %v608, %v618
        %v631 = vmul.f32 %v609, %v618
        %v632 = vmul.f32 %v610, %v618
        %v633 = vmul.f32 %v611, %v618
        %v634 = vmul.f32 %v612, %v618
        %v635 = vmul.f32 %v613, %v618
        %636 = vst.msk [vmem:[%s4] sm:$0xff] %vm222, %v620
        %637 = vst.msk [vmem:[%s4 + $0x8] sm:$0xff] %vm222, %v621
        %638 = vst.msk [vmem:[%s4 + $0x10] sm:$0xff] %vm222, %v622
        %639 = vst.msk [vmem:[%s4 + $0x18] sm:$0xff] %vm222, %v623
        %640 = vst.msk [vmem:[%s4 + $0x20] sm:$0xff] %vm222, %v624
        %641 = vst.msk [vmem:[%s4 + $0x28] sm:$0xff] %vm222, %v625
        %642 = vst.msk [vmem:[%s4 + $0x30] sm:$0xff] %vm222, %v626
        %643 = vst.msk [vmem:[%s4 + $0x38] sm:$0xff] %vm222, %v627
        %644 = vst.msk [vmem:[%s4 + $0x40] sm:$0xff] %vm222, %v628
        %645 = vst.msk [vmem:[%s4 + $0x48] sm:$0xff] %vm222, %v629
        %646 = vst.msk [vmem:[%s4 + $0x50] sm:$0xff] %vm222, %v630
        %647 = vst.msk [vmem:[%s4 + $0x58] sm:$0xff] %vm222, %v631
        %648 = vst.msk [vmem:[%s4 + $0x60] sm:$0xff] %vm222, %v632
        %649 = vst.msk [vmem:[%s4 + $0x68] sm:$0xff] %vm222, %v633
        %650 = vst.msk [vmem:[%s4 + $0x70] sm:$0xff] %vm222, %v634
        %651 = vst.msk [vmem:[%s4 + $0x78] sm:$0xff] %vm222, %v635
      $region44: #{con_hypergraph_conv.2} parent=35 // pred_fallthru
        _
      // Predicated region
      $region45: #{con_hypergraph_conv.2} parent=35 // pred_check
        %p652 = pneg %p122
      $region46: #{con_hypergraph_conv.2} parent=35 // pred_check_branch
        %654 = sbr.rel (%p652) target = $region48
      $region47: #{con_hypergraph_conv.2} parent=35 // pred_region
        _
      $region48: #{con_hypergraph_conv.2} parent=35 // pred_fallthru
        _
      // Predicated region
      $region49: #{con_hypergraph_conv.2} parent=35 // pred_check
        %p655 = pneg %p122
      $region50: #{con_hypergraph_conv.2} parent=35 // pred_check_branch
        %657 = sbr.rel (%p655) target = $region52
      $region51: #{con_hypergraph_conv.2} parent=35 // pred_region
        _
      $region52: #{con_hypergraph_conv.2} parent=35 // pred_fallthru
        _
    $region36: #{con_hypergraph_conv.2} parent=5 // pred_fallthru
      _
    %p658 = scmp.le.s32.totalorder 2, %s10
    // Predicated region
    $region53: #{con_hypergraph_conv.2} parent=5 // pred_check
      %p659 = pneg %p658
    $region54: #{con_hypergraph_conv.2} parent=5 // pred_check_branch
      %661 = sbr.rel (%p659) target = $region56
    $region55: #{con_hypergraph_conv.2} parent=5 // pred_region
      %s662 = ssub.s32 %s10, 2
    $region56: #{con_hypergraph_conv.2} parent=5 // pred_fallthru
      _
  $region6: #{con_hypergraph_conv.2} parent=0 // loop_footer
    %s14 = sadd.s32 1, %s10
  $region7: #{con_hypergraph_conv.2} parent=0 // loop_footer_branch
    %9 = sbr.rel target = $region3
  $region8: #{con_hypergraph_conv.2} parent=0 // loop_exit
    _

// kernel: con_hypergraph_conv.3
$region0: #{con_hypergraph_conv.3}
  #allocation0 [shape = 'u32[]', space=smem, size = 0x4, offset = 0x4, fixed_abs, tag = 'smem constant byte address 0x4 - core index']
  #allocation1 [shape = 'u32[144,128]{1,0:T(1,128)}', space=vmem, size = 0x12000, scoped, tag = 'internal scratch']
  %s0 = inlined_call_operand.vmem [shape: f32[16,16], index: 0, kind: input, shape index: {}]
  %s1 = inlined_call_operand.vmem [shape: f32[128,16], index: 1, kind: input, shape index: {}]
  %s2 = inlined_call_operand.hbm [shape: f32[16,128], index: 2, kind: output, shape index: {}]
  %s3 = sld [smem:[#allocation0]]
  $region41: #{con_hypergraph_conv.3} parent=0
    _
  %s5 = ssub.s32 1, %s3
  %s6 = scalar_select 0, %s5, %s3
  $region1: #{con_hypergraph_conv.3} parent=0
    #allocation2 [shape = 'u8[8192]{0}', space=vmem, size = 0x2000, scoped, tag = 'output window, operand 0']
    #allocation3 [shape = 's32[2]{0}', space=sflag, size = 0x8, scoped, tag = 'scoped memory for con_hypergraph_conv.3']
    %7 = vsyncpa [#allocation3], 0
    %s8 = scalar_lea.sflag [#allocation3], 1
    %9 = vsyncpa %s8, 0
    loop: start=0, step=1, limit=4
    $region2: #{con_hypergraph_conv.3} parent=1 // loop_pre_header
      _
    $region3: #{con_hypergraph_conv.3} parent=1 // loop_header
      %s11 = sphi 0, %s15
      %p12 = scmp.ge.s32.totalorder %s11, 4
      %s21 = sphi 0, %s23
      %s24 = sphi 0, %s21
      %s25 = sphi 0, %s24
      %s41 = sphi 0, %s25
      %s45 = sphi 0, %s45
      %s47 = sphi 0, %s45
      %s48 = sphi 0, %s47
      %s62 = sphi 0, %s48
      %s68 = sphi 0, %s70
      %s71 = sphi 0, %s68
      %s72 = sphi 0, %s71
      %s88 = sphi 0, %s72
    $region4: #{con_hypergraph_conv.3} parent=1 // loop_header_branch
      %14 = sbr.rel (%p12) target = $region8
    $region5: #{con_hypergraph_conv.3} parent=1 // loop_body
      %s16 = ssub.s32 %s11, 1
      %s17 = ssub.s32 %s11, 2
      %s18 = sadd.s32 %s11, 1
      %s19 = ssub.s32 %s11, %s18
      %p20 = scmp.eq.s32.totalorder %s19, 0
      %s22 = sadd.s32 %s21, 1
      %s23 = scalar_select %p20, %s21, %s22
      %p26 = pneg %p20
      %p27 = scmp.eq.s32.totalorder %s11, 1
      %p28 = por %p26, %p27
      %p29 = scmp.ne.s32.totalorder %s21, %s24
      %p30 = scmp.eq.s32.totalorder %s11, 0
      %p31 = por %p29, %p30
      %p32 = scmp.ne.s32.totalorder %s21, %s24
      %p33 = scmp.eq.s32.totalorder %s16, 1
      %p34 = por %p32, %p33
      %p35 = scmp.ne.s32.totalorder %s24, %s25
      %p36 = scmp.eq.s32.totalorder %s16, 0
      %p37 = por %p35, %p36
      %p38 = scmp.ne.s32.totalorder %s24, %s25
      %p39 = scmp.eq.s32.totalorder %s17, 1
      %p40 = por %p38, %p39
      %p42 = scmp.ne.s32.totalorder %s25, %s41
      %p43 = scmp.eq.s32.totalorder %s17, 0
      %p44 = por %p42, %p43
      %s46 = sadd.s32 %s45, 1
      %p49 = scmp.eq.s32.totalorder %s11, 1
      %p50 = scmp.ne.s32.totalorder %s45, %s47
      %p51 = scmp.eq.s32.totalorder %s11, 0
      %p52 = por %p50, %p51
      %p53 = scmp.ne.s32.totalorder %s45, %s47
      %p54 = scmp.eq.s32.totalorder %s16, 1
      %p55 = por %p53, %p54
      %p56 = scmp.ne.s32.totalorder %s47, %s48
      %p57 = scmp.eq.s32.totalorder %s16, 0
      %p58 = por %p56, %p57
      %p59 = scmp.ne.s32.totalorder %s47, %s48
      %p60 = scmp.eq.s32.totalorder %s17, 1
      %p61 = por %p59, %p60
      %p63 = scmp.ne.s32.totalorder %s48, %s62
      %p64 = scmp.eq.s32.totalorder %s17, 0
      %p65 = por %p63, %p64
      %s66 = ssub.s32 %s11, %s18
      %p67 = scmp.eq.s32.totalorder %s66, 0
      %s69 = sadd.s32 %s68, 1
      %s70 = scalar_select %p67, %s68, %s69
      %p73 = pneg %p67
      %p74 = scmp.eq.s32.totalorder %s11, 1
      %p75 = por %p73, %p74
      %p76 = scmp.ne.s32.totalorder %s68, %s71
      %p77 = scmp.eq.s32.totalorder %s11, 0
      %p78 = por %p76, %p77
      %p79 = scmp.ne.s32.totalorder %s68, %s71
      %p80 = scmp.eq.s32.totalorder %s16, 1
      %p81 = por %p79, %p80
      %p82 = scmp.ne.s32.totalorder %s71, %s72
      %p83 = scmp.eq.s32.totalorder %s16, 0
      %p84 = por %p82, %p83
      %p85 = scmp.ne.s32.totalorder %s71, %s72
      %p86 = scmp.eq.s32.totalorder %s17, 1
      %p87 = por %p85, %p86
      %p89 = scmp.ne.s32.totalorder %s72, %s88
      %p90 = scmp.eq.s32.totalorder %s17, 0
      %p91 = por %p89, %p90
      %p92 = scmp.le.s32.totalorder 1, %s11
      %p93 = scmp.lt.s32.totalorder %s11, 3
      %p94 = pnand %p92, %p93
      %p95 = pneg %p94
      // Predicated region
      $region9: #{con_hypergraph_conv.3} parent=5 // pred_check
        _
      $region10: #{con_hypergraph_conv.3} parent=5 // pred_check_branch
        %97 = sbr.rel (%p94) target = $region12
      $region11: #{con_hypergraph_conv.3} parent=5 // pred_region
        %s98 = ssub.s32 %s11, 1
        // Predicated region
        $region13: #{con_hypergraph_conv.3} parent=11 // pred_check
          %p99 = pneg %p58
        $region14: #{con_hypergraph_conv.3} parent=11 // pred_check_branch
          %101 = sbr.rel (%p99) target = $region16
        $region15: #{con_hypergraph_conv.3} parent=11 // pred_region
          _
        $region16: #{con_hypergraph_conv.3} parent=11 // pred_fallthru
          _
      $region12: #{con_hypergraph_conv.3} parent=5 // pred_fallthru
        _
      %p102 = scmp.lt.s32.totalorder %s11, 2
      // Predicated region
      $region17: #{con_hypergraph_conv.3} parent=5 // pred_check
        %p103 = pneg %p102
      $region18: #{con_hypergraph_conv.3} parent=5 // pred_check_branch
        %105 = sbr.rel (%p103) target = $region20
      $region19: #{con_hypergraph_conv.3} parent=5 // pred_region
        // Predicated region
        $region21: #{con_hypergraph_conv.3} parent=19 // pred_check
          %p106 = pneg %p31
        $region22: #{con_hypergraph_conv.3} parent=19 // pred_check_branch
          %108 = sbr.rel (%p106) target = $region24
        $region23: #{con_hypergraph_conv.3} parent=19 // pred_region
          %p109 = scmp.lt.s32.totalorder %s11, 1
          %s110 = scalar_select %p109, %s11, 1
          %s111 = smul.addr %s110, 8
          %s112 = scalar_lea.vmem %s0, %s111
        $region24: #{con_hypergraph_conv.3} parent=19 // pred_fallthru
          _
      $region20: #{con_hypergraph_conv.3} parent=5 // pred_fallthru
        _
      %p113 = scmp.le.s32.totalorder 1, %s11
      %p114 = scmp.lt.s32.totalorder %s11, 3
      %p115 = pnand %p113, %p114
      %p116 = pneg %p115
      // Predicated region
      $region25: #{con_hypergraph_conv.3} parent=5 // pred_check
        _
      $region26: #{con_hypergraph_conv.3} parent=5 // pred_check_branch
        %118 = sbr.rel (%p115) target = $region28
      $region27: #{con_hypergraph_conv.3} parent=5 // pred_region
        %s119 = ssub.s32 %s11, 1
        %p120 = scmp.lt.s32.totalorder %s16, 1
        %s121 = scalar_select %p120, %s16, 1
        %s122 = smul.addr %s121, 8
        %s123 = scalar_lea.vmem %s0, %s122
        %p124 = pneg %p37
        %p125 = pneg %p34
        %p126 = pneg %p58
        %p127 = pneg %p55
        %p128 = pneg %p84
        %p129 = pneg %p81
        %s130 = sand.u32 %s71, 1
        %s131 = scalar_lea.sflag [#allocation3], %s130
        %s132 = sand.u32 %s71, 1
        %s133 = smul.addr %s132, 8
        %s134 = scalar_lea.vmem [#allocation2], %s133
        %p135 = scmp.lt.s32.totalorder %s16, 1
        %s136 = scalar_select %p135, %s16, 1
        %s137 = smul.addr %s136, 8
        %s138 = scalar_lea.vmem %s0, %s137
        %v139 = vld [vmem:[%s138] sm:$0xff]
        %vm140 = vcmask 130048
        %v141 = vsel %vm140, %v139, 0.0
        %142 = vadd.xlane.f32.xlu0 %v141
        %v143 = vpop.xlane.xlu0 %142
        %vm144 = vcmp.gt.f32.partialorder %v143, 0.0
        %v145 = vrcp.pop %v143
        %v146 = vmul.f32 1.0, %v145
        %v147 = vsel %vm144, %v146, 0.0
        %v148 = vld [vmem:[%s1] sm:$0xff]
        %v149 = vld [vmem:[%s1 + $0x8] sm:$0xff]
        %v150 = vld [vmem:[%s1 + $0x10] sm:$0xff]
        %v151 = vld [vmem:[%s1 + $0x18] sm:$0xff]
        %v152 = vld [vmem:[%s1 + $0x20] sm:$0xff]
        %v153 = vld [vmem:[%s1 + $0x28] sm:$0xff]
        %v154 = vld [vmem:[%s1 + $0x30] sm:$0xff]
        %v155 = vld [vmem:[%s1 + $0x38] sm:$0xff]
        %v156 = vld [vmem:[%s1 + $0x40] sm:$0xff]
        %v157 = vld [vmem:[%s1 + $0x48] sm:$0xff]
        %v158 = vld [vmem:[%s1 + $0x50] sm:$0xff]
        %v159 = vld [vmem:[%s1 + $0x58] sm:$0xff]
        %v160 = vld [vmem:[%s1 + $0x60] sm:$0xff]
        %v161 = vld [vmem:[%s1 + $0x68] sm:$0xff]
        %v162 = vld [vmem:[%s1 + $0x70] sm:$0xff]
        %v163 = vld [vmem:[%s1 + $0x78] sm:$0xff]
        %v165 = vsel %vm140, %v139, 0
        %v168 = vsel %vm140, %v148, 0
        %v171 = vsel %vm140, %v149, 0
        %v174 = vsel %vm140, %v150, 0
        %v177 = vsel %vm140, %v151, 0
        %v180 = vsel %vm140, %v152, 0
        %v183 = vsel %vm140, %v153, 0
        %v186 = vsel %vm140, %v154, 0
        %v189 = vsel %vm140, %v155, 0
        %v192 = vsel %vm140, %v156, 0
        %v195 = vsel %vm140, %v157, 0
        %v198 = vsel %vm140, %v158, 0
        %v201 = vsel %vm140, %v159, 0
        %v204 = vsel %vm140, %v160, 0
        %v207 = vsel %vm140, %v161, 0
        %v210 = vsel %vm140, %v162, 0
        %v213 = vsel %vm140, %v163, 0
        %215 = vmatprep.subr.mxu0 0.0
        %216 = vmatpush1.xpose.msra.mxu0 %v213
        %217 = vmatprep.subr.mxu0 0.0
        %218 = vmatpush1.xpose.msra.mxu0 %v210
        %219 = vmatprep.subr.mxu0 0.0
        %220 = vmatpush1.xpose.msra.mxu0 %v207
        %221 = vmatprep.subr.mxu0 0.0
        %222 = vmatpush1.xpose.msra.mxu0 %v204
        %223 = vmatprep.subr.mxu0 0.0
        %224 = vmatpush1.xpose.msra.mxu0 %v201
        %225 = vmatprep.subr.mxu0 0.0
        %226 = vmatpush1.xpose.msra.mxu0 %v198
        %227 = vmatprep.subr.mxu0 0.0
        %228 = vmatpush1.xpose.msra.mxu0 %v195
        %229 = vmatprep.subr.mxu0 0.0
        %230 = vmatpush1.xpose.msra.mxu0 %v192
        %231 = vmatprep.subr.mxu0 0.0
        %232 = vmatpush1.xpose.msra.mxu0 %v189
        %233 = vmatprep.subr.mxu0 0.0
        %234 = vmatpush1.xpose.msra.mxu0 %v186
        %235 = vmatprep.subr.mxu0 0.0
        %236 = vmatpush1.xpose.msra.mxu0 %v183
        %237 = vmatprep.subr.mxu0 0.0
        %238 = vmatpush1.xpose.msra.mxu0 %v180
        %239 = vmatprep.subr.mxu0 0.0
        %240 = vmatpush1.xpose.msra.mxu0 %v177
        %241 = vmatprep.subr.mxu0 0.0
        %242 = vmatpush1.xpose.msra.mxu0 %v174
        %243 = vmatprep.subr.mxu0 0.0
        %244 = vmatpush1.xpose.msra.mxu0 %v171
        %245 = vmatprep.subr.mxu0 0.0
        %246 = vmatpush1.xpose.msra.mxu0 %v168
        %247 = vmatprep.subr.mxu0 0.0
        %248 = vmatpush2.xpose.msra.mxu0 0.0
        %249 = vmatprep.subr.mxu0 0.0
        %250 = vmatpush2.xpose.msra.mxu0 0.0
        %251 = vmatprep.subr.mxu0 0.0
        %252 = vmatpush2.xpose.msra.mxu0 0.0
        %253 = vmatprep.subr.mxu0 0.0
        %254 = vmatpush2.xpose.msra.mxu0 0.0
        %255 = vmatprep.subr.mxu0 0.0
        %256 = vmatpush2.xpose.msra.mxu0 0.0
        %257 = vmatprep.subr.mxu0 0.0
        %258 = vmatpush2.xpose.msra.mxu0 0.0
        %259 = vmatprep.subr.mxu0 0.0
        %260 = vmatpush2.xpose.msra.mxu0 0.0
        %261 = vmatprep.subr.mxu0 0.0
        %262 = vmatpush2.xpose.msra.mxu0 0.0
        %263 = vmatprep.subr.mxu0 0.0
        %264 = vmatpush2.xpose.msra.mxu0 0.0
        %265 = vmatprep.subr.mxu0 0.0
        %266 = vmatpush2.xpose.msra.mxu0 0.0
        %267 = vmatprep.subr.mxu0 0.0
        %268 = vmatpush2.xpose.msra.mxu0 0.0
        %269 = vmatprep.subr.mxu0 0.0
        %270 = vmatpush2.xpose.msra.mxu0 0.0
        %271 = vmatprep.subr.mxu0 0.0
        %272 = vmatpush2.xpose.msra.mxu0 0.0
        %273 = vmatprep.subr.mxu0 0.0
        %274 = vmatpush2.xpose.msra.mxu0 0.0
        %275 = vmatprep.subr.mxu0 0.0
        %276 = vmatpush2.xpose.msra.mxu0 0.0
        %277 = vmatprep.subr.mxu0 0.0
        %278 = vmatpush2.xpose.msra.mxu0 0.0
        %279 = vmatprep.mubr.f32.mxu0 0.0
        %280 = vmatmul.mubr.f32.gmra.mxu0 %v165
        %v281 = vpop.f32.mrf.mxu0
        %v282 = vadd.f32 0.0, %v281
        %v283 = vpop.f32.mrf.mxu0
        %284 = vdwg.mxu0
        %v285 = vmul.f32 %v282, %v147
        %v286 = vmax.f32 %v285, 0.0
        %287 = vst [vmem:[%s134] sm:$0xff] %v286
        %s288 = sand.u32 %s71, 1
        %s289 = scalar_lea.sflag [#allocation3], %s288
        %s290 = sand.u32 %s71, 1
        %s291 = smul.addr %s290, 8
        %s292 = scalar_lea.vmem [#allocation2], %s291
        // Predicated region
        $region29: #{con_hypergraph_conv.3} parent=27 // pred_check
          %p293 = pneg %p81
        $region30: #{con_hypergraph_conv.3} parent=27 // pred_check_branch
          %295 = sbr.rel (%p293) target = $region32
        $region31: #{con_hypergraph_conv.3} parent=27 // pred_region
          %s297 = ssub.s32 128, 128
          %298 = vsyncadd %s289, %s297
          %s299 = smul.addr %s16, 128
          %s300 = scalar_lea.hbm %s2, %s299
          %s302 = sshll.u32 %s292, 4
          %s303 = int_to_ptr.vmem [resolvable:$true] %s302
          %305 = dma.vmem_to_hbm [thread:$0]  %s303, 128, %s300, %s289
        $region32: #{con_hypergraph_conv.3} parent=27 // pred_fallthru
          _
      $region28: #{con_hypergraph_conv.3} parent=5 // pred_fallthru
        _
      %p306 = scmp.le.s32.totalorder 2, %s11
      // Predicated region
      $region33: #{con_hypergraph_conv.3} parent=5 // pred_check
        %p307 = pneg %p306
      $region34: #{con_hypergraph_conv.3} parent=5 // pred_check_branch
        %309 = sbr.rel (%p307) target = $region36
      $region35: #{con_hypergraph_conv.3} parent=5 // pred_region
        %s310 = ssub.s32 %s11, 2
        // Predicated region
        $region37: #{con_hypergraph_conv.3} parent=35 // pred_check
          %p311 = pneg %p87
        $region38: #{con_hypergraph_conv.3} parent=35 // pred_check_branch
          %313 = sbr.rel (%p311) target = $region40
        $region39: #{con_hypergraph_conv.3} parent=35 // pred_region
          %s314 = sand.u32 %s72, 1
          %s315 = scalar_lea.sflag [#allocation3], %s314
          %s316 = sand.u32 %s72, 1
          %s317 = smul.addr %s316, 8
          %s318 = scalar_lea.vmem [#allocation2], %s317
          %319 = dma.done %s315, 128
        $region40: #{con_hypergraph_conv.3} parent=35 // pred_fallthru
          _
      $region36: #{con_hypergraph_conv.3} parent=5 // pred_fallthru
        _
    $region6: #{con_hypergraph_conv.3} parent=1 // loop_footer
      %s15 = sadd.s32 1, %s11
    $region7: #{con_hypergraph_conv.3} parent=1 // loop_footer_branch
      %10 = sbr.rel target = $region3
    $region8: #{con_hypergraph_conv.3} parent=1 // loop_exit
      _
    %320 = vsyncpa [#allocation3], 1
    %s321 = scalar_lea.sflag [#allocation3], 1
    %322 = vsyncpa %s321, 1

</llo_original>
